<compile_context>
chip_gen: v7x
topology: tpu7x:2x2x1
jax: 0.10.0
libtpu: 0.0.40
codegen_flags: <defaults>
</compile_context>

<pallas_src>
import functools

import jax
import jax.numpy as jnp
from jax.experimental import pallas as pl
from jax.experimental.pallas import tpu as pltpu


def _round_up(n, m):
    return ((n + m - 1) // m) * m


def _sublane_pack(dtype):
    # Native sublane packing: 8 for 32-bit, 16 for 16-bit, 32 for 8-bit dtypes.
    bits = jnp.dtype(dtype).itemsize * 8
    return max(8, 256 // bits)


def _vmem_limit_bytes():
    """Per-generation scoped-VMEM limit (~75% of physical, capped at 100 MiB)."""
    try:
        cap = getattr(pltpu.get_tpu_info(), "vmem_capacity_bytes", None)
    except Exception:
        cap = None
    if not cap:
        return 48 * 1024 * 1024          # safe fallback for v7x's 64 MiB / TC
    return int(min(cap * 3 // 4, 100 * 1024 * 1024))


def _fold_weight(w, b, input_dim):
    """cat-order weight (4D, H) -> folded (3D, H) = [W0+W3; W1-W3; W2].

    Folding is done in f32 (then cast back to the weight dtype) so low-precision
    weights keep rounding close to the reference single GEMM.  For static
    params this is constant-folded by jit / can be precomputed once.
    """
    D = input_dim
    wf = w.astype(jnp.float32)
    w0, w1, w2, w3 = wf[:D], wf[D:2 * D], wf[2 * D:3 * D], wf[3 * D:]
    w_folded = jnp.concatenate([w0 + w3, w1 - w3, w2], axis=0).astype(w.dtype)
    return w_folded, b.astype(jnp.float32)


def _fusion_kernel_fused(xy_ref, w_ref, b_ref, o_ref, *, input_dim):
    """Lane-aligned path (D % 128 == 0): single K=3D MXU dot per tile."""
    D = input_dim
    xy = xy_ref[...]                                   # (tm, 2D) = [x | y]
    x = xy[:, :D]
    y = xy[:, D:]
    z = jnp.concatenate([xy, x * y], axis=1)           # (tm, 3D), aligned concat
    acc = jnp.dot(z, w_ref[...], preferred_element_type=jnp.float32)
    acc += b_ref[...]                                  # f32 bias, row-broadcast
    o_ref[...] = jnp.tanh(acc).astype(o_ref.dtype)


def _fusion_kernel_split(x_ref, y_ref, w_ref, b_ref, o_ref, *, input_dim):
    """Unaligned-D fallback: static sublane ref-slices of the weight, 3 dots."""
    D = input_dim
    x = x_ref[...]
    y = y_ref[...]
    acc = jnp.dot(x, w_ref[:D, :], preferred_element_type=jnp.float32)
    acc += jnp.dot(y, w_ref[D:2 * D, :], preferred_element_type=jnp.float32)
    acc += jnp.dot(x * y, w_ref[2 * D:, :], preferred_element_type=jnp.float32)
    acc += b_ref[...]
    o_ref[...] = jnp.tanh(acc).astype(o_ref.dtype)


def fusion_forward(x, y, w, b, *, tm=512, interpret=False):
    """x, y: (B, S, D); w: (4D, H) in cat order [x, y, x*y, x-y]; b: (H,).

    Returns (B, S, H) = tanh(cat([x, y, x*y, x-y], -1) @ w + b).
    """
    B, S, D = x.shape
    assert y.shape == x.shape
    assert w.shape[0] == 4 * D
    H = w.shape[1]

    in_bytes = jnp.dtype(x.dtype).itemsize
    out_bytes = in_bytes
    w_bytes = jnp.dtype(w.dtype).itemsize

    vmem_limit = _vmem_limit_bytes()
    budget = (vmem_limit * 4) // 5

    # ---- one-time param prep (constant-folded under jit for static params) --
    w_folded, b_f32 = _fold_weight(w, b, D)            # (3D, H), (H,) f32

    # ---- N (H) tiling: lane-dense output, bounded weight-tile footprint -----
    H_pad = max(128, _round_up(H, 128))
    tn = H_pad if H_pad <= 2048 else 1024
    #  weight tile may be double-buffered -> keep 2x tile under half the budget
    while tn > 128 and 2 * 3 * D * tn * w_bytes > budget // 2:
        tn = max(128, _round_up(tn // 2, 128))
    grid_n = pl.cdiv(H_pad, tn)
    H_pad = grid_n * tn
    if H_pad != H:
        w_folded = jnp.pad(w_folded, ((0, 0), (0, H_pad - H)))
        b_f32 = jnp.pad(b_f32, (0, H_pad - H))
    b2 = b_f32.reshape(1, H_pad)

    # ---- M (row) tiling, rounded to dtype-native sublane packing ------------
    M = B * S
    sub = _sublane_pack(x.dtype)
    M_align = _round_up(M, sub)
    tm = max(sub, _round_up(min(tm, M_align), sub))

    def vmem_est(tm_, tn_):
        act = 2 * tm_ * 2 * D * in_bytes               # activation tiles, 2-buf
        wgt = 2 * 3 * D * tn_ * w_bytes                # weight tile, 2-buf
        bias = 2 * tn_ * 4
        out = 2 * tm_ * tn_ * out_bytes
        tmp = tm_ * 3 * D * in_bytes + tm_ * tn_ * 4   # z + f32 acc temporaries
        return act + wgt + bias + out + tmp

    while tm > sub and vmem_est(tm, tn) > budget:
        tm = max(sub, _round_up(tm // 2, sub))

    grid_m = pl.cdiv(M, tm)
    M_pad = grid_m * tm

    # ---- activation operands -------------------------------------------------
    x2 = x.reshape(M, D)
    y2 = y.reshape(M, D)
    use_fused = (D % 128 == 0)
    if use_fused:
        act = (jnp.concatenate([x2, y2], axis=1),)     # (M, 2D): one DMA stream
        act_specs = [pl.BlockSpec((tm, 2 * D), lambda n, m: (m, 0))]
        kernel = functools.partial(_fusion_kernel_fused, input_dim=D)
    else:
        act = (x2, y2)
        act_specs = [pl.BlockSpec((tm, D), lambda n, m: (m, 0)),
                     pl.BlockSpec((tm, D), lambda n, m: (m, 0))]
        kernel = functools.partial(_fusion_kernel_split, input_dim=D)
    if M_pad != M:
        act = tuple(jnp.pad(a, ((0, M_pad - M), (0, 0))) for a in act)

    out = pl.pallas_call(
        kernel,
        out_shape=jax.ShapeDtypeStruct((M_pad, H_pad), x.dtype),
        grid_spec=pltpu.PrefetchScalarGridSpec(
            num_scalar_prefetch=0,
            # n outer / m inner: weight tile stays VMEM-resident across the
            # whole inner M loop; both axes are megacore-parallel.
            grid=(grid_n, grid_m),
            in_specs=act_specs + [
                pl.BlockSpec((3 * D, tn), lambda n, m: (0, n)),   # folded weight
                pl.BlockSpec((1, tn), lambda n, m: (0, n)),       # f32 bias
            ],
            out_specs=pl.BlockSpec((tm, tn), lambda n, m: (m, n)),
        ),
        compiler_params=pltpu.CompilerParams(
            dimension_semantics=("parallel", "parallel"),
            vmem_limit_bytes=vmem_limit,
        ),
        interpret=interpret,
    )(*act, w_folded, b2)

    return out[:M, :H].reshape(B, S, H)


def reference_forward(x, y, w, b):
    z = jnp.concatenate([x, y, x * y, x - y], axis=2)
    return jnp.tanh(z @ w + b)


def _run_case(key, batch, seq, input_dim, hidden_dim, atol):
    kx, ky, kw, kb = jax.random.split(key, 4)
    x = jax.random.normal(kx, (batch, seq, input_dim), dtype=jnp.float32)
    y = jax.random.normal(ky, (batch, seq, input_dim), dtype=jnp.float32)
    fan_in = input_dim * 4
    bound = 1.0 / (fan_in ** 0.5)
    w = jax.random.uniform(kw, (fan_in, hidden_dim), jnp.float32, -bound, bound)
    b = jax.random.uniform(kb, (hidden_dim,), jnp.float32, -bound, bound)

    out = fusion_forward(x, y, w, b)
    jax.block_until_ready(out)

    ref = reference_forward(x, y, w, b)
    assert out.shape == (batch, seq, hidden_dim)
    err = float(jnp.max(jnp.abs(out - ref)))
    assert jnp.allclose(out, ref, atol=atol, rtol=atol), err


if __name__ == "__main__":
    key = jax.random.PRNGKey(0)
    k1, k2 = jax.random.split(key)

    # Small shapes implied by the module (unaligned-D fallback path).
    _run_case(k1, batch=2, seq=8, input_dim=32, hidden_dim=32, atol=2e-5)

    # Lane-aligned path: single concatenated operand + one K=3D MXU dot.
    # Slightly looser tolerance: larger-K accumulation order differs from XLA.
    _run_case(k2, batch=2, seq=8, input_dim=128, hidden_dim=128, atol=2e-4)

    print("KERNEL_OK")
</pallas_src>

<mosaic_0001>
module attributes {stable_mosaic.version = 11 : i64} {
  func.func @_fusion_kernel_split(%arg0: i32, %arg1: i32, %arg2: memref<16x32xf32, #tpu.memory_space<vmem>>, %arg3: memref<16x32xf32, #tpu.memory_space<vmem>>, %arg4: memref<96x128xf32, #tpu.memory_space<vmem>>, %arg5: memref<1x128xf32, #tpu.memory_space<vmem>>, %arg6: memref<16x128xf32, #tpu.memory_space<vmem>>) attributes {dimension_semantics = [#tpu.dimension_semantics<parallel>, #tpu.dimension_semantics<parallel>], iteration_bounds = array<i64: 1, 1>, scalar_prefetch = 0 : i64, scratch_operands = 0 : i64, tpu.core_type = #tpu.core_type<tc>, window_params = [{transform_indices = @transform_0, window_bounds = array<i64: 16, 32>}, {transform_indices = @transform_1, window_bounds = array<i64: 16, 32>}, {transform_indices = @transform_2, window_bounds = array<i64: 96, 128>}, {transform_indices = @transform_3, window_bounds = array<i64: 1, 128>}, {transform_indices = @transform_4, window_bounds = array<i64: 16, 128>}]} {
    %c0 = arith.constant 0 : index
    %c0_0 = arith.constant 0 : index
    %0 = vector.load %arg2[%c0, %c0_0] : memref<16x32xf32, #tpu.memory_space<vmem>>, vector<16x32xf32>
    %c0_1 = arith.constant 0 : index
    %c0_2 = arith.constant 0 : index
    %1 = vector.load %arg3[%c0_1, %c0_2] : memref<16x32xf32, #tpu.memory_space<vmem>>, vector<16x32xf32>
    %c0_3 = arith.constant 0 : index
    %c0_4 = arith.constant 0 : index
    %2 = vector.load %arg4[%c0_3, %c0_4] : memref<96x128xf32, #tpu.memory_space<vmem>>, vector<32x128xf32>
    %cst = arith.constant dense<0.000000e+00> : vector<16x128xf32>
    %3 = tpu.matmul %0, %2, %cst {dimension_numbers = #tpu.dot_dimension_numbers<[1], [0], [0], [1], [0, 0, 1, 1], [], []>} : vector<16x32xf32>, vector<32x128xf32>, vector<16x128xf32> -> vector<16x128xf32>
    %c32 = arith.constant 32 : index
    %c0_5 = arith.constant 0 : index
    %4 = vector.load %arg4[%c32, %c0_5] : memref<96x128xf32, #tpu.memory_space<vmem>>, vector<32x128xf32>
    %cst_6 = arith.constant dense<0.000000e+00> : vector<16x128xf32>
    %5 = tpu.matmul %1, %4, %cst_6 {dimension_numbers = #tpu.dot_dimension_numbers<[1], [0], [0], [1], [0, 0, 1, 1], [], []>} : vector<16x32xf32>, vector<32x128xf32>, vector<16x128xf32> -> vector<16x128xf32>
    %6 = arith.addf %3, %5 : vector<16x128xf32>
    %7 = arith.mulf %0, %1 : vector<16x32xf32>
    %c64 = arith.constant 64 : index
    %c0_7 = arith.constant 0 : index
    %8 = vector.load %arg4[%c64, %c0_7] : memref<96x128xf32, #tpu.memory_space<vmem>>, vector<32x128xf32>
    %cst_8 = arith.constant dense<0.000000e+00> : vector<16x128xf32>
    %9 = tpu.matmul %7, %8, %cst_8 {dimension_numbers = #tpu.dot_dimension_numbers<[1], [0], [0], [1], [0, 0, 1, 1], [], []>} : vector<16x32xf32>, vector<32x128xf32>, vector<16x128xf32> -> vector<16x128xf32>
    %10 = arith.addf %6, %9 : vector<16x128xf32>
    %c0_9 = arith.constant 0 : index
    %c0_10 = arith.constant 0 : index
    %11 = vector.load %arg5[%c0_9, %c0_10] : memref<1x128xf32, #tpu.memory_space<vmem>>, vector<1x128xf32>
    %12 = vector.broadcast %11 : vector<1x128xf32> to vector<16x128xf32>
    %13 = arith.addf %10, %12 : vector<16x128xf32>
    %14 = math.tanh %13 : vector<16x128xf32>
    %c0_11 = arith.constant 0 : index
    %c0_12 = arith.constant 0 : index
    %15 = vector.load %arg6[%c0_11, %c0_12] : memref<16x128xf32, #tpu.memory_space<vmem>>, vector<16x128xf32>
    tpu.vector_store %arg6[%c0_11, %c0_12], %14 {strides = array<i32>} : memref<16x128xf32, #tpu.memory_space<vmem>>, vector<16x128xf32>,
    return
  }
  func.func @transform_0(%arg0: i32, %arg1: i32) -> (i32, i32) {
    %c0_i32 = arith.constant 0 : i32
    %c0_i32_0 = arith.constant 0 : i32
    return %arg1, %c0_i32 : i32, i32
  }
  func.func @transform_1(%arg0: i32, %arg1: i32) -> (i32, i32) {
    %c0_i32 = arith.constant 0 : i32
    %c0_i32_0 = arith.constant 0 : i32
    return %arg1, %c0_i32 : i32, i32
  }
  func.func @transform_2(%arg0: i32, %arg1: i32) -> (i32, i32) {
    %c0_i32 = arith.constant 0 : i32
    %c0_i32_0 = arith.constant 0 : i32
    return %c0_i32, %arg0 : i32, i32
  }
  func.func @transform_3(%arg0: i32, %arg1: i32) -> (i32, i32) {
    %c0_i32 = arith.constant 0 : i32
    %c0_i32_0 = arith.constant 0 : i32
    return %c0_i32, %arg0 : i32, i32
  }
  func.func @transform_4(%arg0: i32, %arg1: i32) -> (i32, i32) {
    %c0_i32 = arith.constant 0 : i32
    return %arg1, %arg0 : i32, i32
  }
}

</mosaic_0001>

<llo_original>
// kernel: tpu_custom_call.1
$region0: #{tpu_custom_call.1}
  #allocation0 [shape = 'u32[]', space=smem, size = 0x4, offset = 0x4, fixed_abs, tag = 'smem constant byte address 0x4 - core index']
  #allocation1 [shape = 'u32[144,128]{1,0:T(1,128)}', space=vmem, size = 0x12000, scoped, tag = 'internal scratch']
  %s0 = inlined_call_operand.hbm [shape: f32[16,32], index: 0, kind: input, shape index: {}]
  %s1 = inlined_call_operand.hbm [shape: f32[16,32], index: 1, kind: input, shape index: {}]
  %s2 = inlined_call_operand.hbm [shape: f32[96,128], index: 2, kind: input, shape index: {}]
  %s3 = inlined_call_operand.vmem [shape: f32[1,128], index: 3, kind: input, shape index: {}]
  %s4 = inlined_call_operand.hbm [shape: f32[16,128], index: 4, kind: output, shape index: {}]
  %s5 = sld [smem:[#allocation0]]
  $region38: #{tpu_custom_call.1} parent=0
    _
  %s7 = ssub.s32 1, %s5
  %s8 = scalar_select 0, %s7, %s5
  $region1: #{tpu_custom_call.1} parent=0
    #allocation2 [shape = 'u8[8192]{0}', space=vmem, size = 0x2000, scoped, tag = 'input window, operand 0, single buffered']
    #allocation3 [shape = 's32[1]{0}', space=sflag, size = 0x4, scoped, tag = 'scoped memory for tpu_custom_call.1']
    #allocation4 [shape = 's32[1]{0}', space=sflag, size = 0x4, scoped, tag = 'scoped memory for tpu_custom_call.1']
    #allocation5 [shape = 'u8[8192]{0}', space=vmem, size = 0x2000, scoped, tag = 'input window, operand 1, single buffered']
    #allocation6 [shape = 's32[1]{0}', space=sflag, size = 0x4, scoped, tag = 'scoped memory for tpu_custom_call.1']
    #allocation7 [shape = 'u8[49152]{0}', space=vmem, size = 0xc000, scoped, tag = 'input window, operand 2, single buffered']
    #allocation8 [shape = 'u8[8192]{0}', space=vmem, size = 0x2000, scoped, tag = 'output window, operand 0, single buffered']
    %9 = vsyncpa [#allocation3], 0
    %10 = vsyncpa [#allocation6], 0
    %11 = vsyncpa [#allocation4], 0
    // Predicated region
    $region2: #{tpu_custom_call.1} parent=1 // pred_check
      _
    $region3: #{tpu_custom_call.1} parent=1 // pred_check_branch
      %13 = sbr.rel (0) target = $region5
    $region4: #{tpu_custom_call.1} parent=1 // pred_region
      %s15 = ssub.s32 256, 256
      %16 = vsyncadd [#allocation3], %s15
      %s17 = sshll.u32 [#allocation2], 4
      %s18 = int_to_ptr.vmem [resolvable:$true] %s17
      %23 = dma.hbm_to_vmem [thread:$0]  %s0, 256, %s18, [#allocation3], 128, 128, 8
    $region5: #{tpu_custom_call.1} parent=1 // pred_fallthru
      _
    // Predicated region
    $region6: #{tpu_custom_call.1} parent=1 // pred_check
      _
    $region7: #{tpu_custom_call.1} parent=1 // pred_check_branch
      %25 = sbr.rel (0) target = $region9
    $region8: #{tpu_custom_call.1} parent=1 // pred_region
      %s27 = ssub.s32 256, 256
      %28 = vsyncadd [#allocation6], %s27
      %s29 = sshll.u32 [#allocation5], 4
      %s30 = int_to_ptr.vmem [resolvable:$true] %s29
      %35 = dma.hbm_to_vmem [thread:$0]  %s1, 256, %s30, [#allocation6], 128, 128, 8
    $region9: #{tpu_custom_call.1} parent=1 // pred_fallthru
      _
    // Predicated region
    $region10: #{tpu_custom_call.1} parent=1 // pred_check
      _
    $region11: #{tpu_custom_call.1} parent=1 // pred_check_branch
      %37 = sbr.rel (0) target = $region13
    $region12: #{tpu_custom_call.1} parent=1 // pred_region
      %s39 = ssub.s32 1536, 1536
      %40 = vsyncadd [#allocation6], %s39
      %s41 = sshll.u32 [#allocation7], 4
      %s42 = int_to_ptr.vmem [resolvable:$true] %s41
      %47 = dma.hbm_to_vmem [thread:$0]  %s2, 1536, %s42, [#allocation6], 128, 128, 8
    $region13: #{tpu_custom_call.1} parent=1 // pred_fallthru
      _
    // Predicated region
    $region14: #{tpu_custom_call.1} parent=1 // pred_check
      _
    $region15: #{tpu_custom_call.1} parent=1 // pred_check_branch
      %49 = sbr.rel (0) target = $region17
    $region16: #{tpu_custom_call.1} parent=1 // pred_region
      _
    $region17: #{tpu_custom_call.1} parent=1 // pred_fallthru
      _
    // Predicated region
    $region18: #{tpu_custom_call.1} parent=1 // pred_check
      _
    $region19: #{tpu_custom_call.1} parent=1 // pred_check_branch
      %51 = sbr.rel (0) target = $region21
    $region20: #{tpu_custom_call.1} parent=1 // pred_region
      %52 = dma.done [#allocation3], 256
    $region21: #{tpu_custom_call.1} parent=1 // pred_fallthru
      _
    // Predicated region
    $region22: #{tpu_custom_call.1} parent=1 // pred_check
      _
    $region23: #{tpu_custom_call.1} parent=1 // pred_check_branch
      %54 = sbr.rel (0) target = $region25
    $region24: #{tpu_custom_call.1} parent=1 // pred_region
      %55 = dma.done [#allocation6], 256
    $region25: #{tpu_custom_call.1} parent=1 // pred_fallthru
      _
    // Predicated region
    $region26: #{tpu_custom_call.1} parent=1 // pred_check
      _
    $region27: #{tpu_custom_call.1} parent=1 // pred_check_branch
      %57 = sbr.rel (0) target = $region29
    $region28: #{tpu_custom_call.1} parent=1 // pred_region
      %58 = dma.done [#allocation6], 1536
    $region29: #{tpu_custom_call.1} parent=1 // pred_fallthru
      _
    %v59 = vld [vmem:[#allocation2] sm:$0xff]
    %v60 = vld [vmem:[#allocation2 + $0x8] sm:$0xff]
    %v61 = vld [vmem:[#allocation5] sm:$0xff]
    %v62 = vld [vmem:[#allocation5 + $0x8] sm:$0xff]
    %v63 = vld [vmem:[#allocation7] sm:$0xff]
    %v64 = vld [vmem:[#allocation7 + $0x8] sm:$0xff]
    %v65 = vld [vmem:[#allocation7 + $0x10] sm:$0xff]
    %v66 = vld [vmem:[#allocation7 + $0x18] sm:$0xff]
    %v67 = vld [vmem:[#allocation7 + $0x20] sm:$0xff]
    %v68 = vld [vmem:[#allocation7 + $0x28] sm:$0xff]
    %v69 = vld [vmem:[#allocation7 + $0x30] sm:$0xff]
    %v70 = vld [vmem:[#allocation7 + $0x38] sm:$0xff]
    %vm71 = vcmask 261120
    %v73 = vsel %vm71, %v61, 0
    %v76 = vsel %vm71, %v62, 0
    %78 = vmatprep.subr.mxu0 0.0
    %79 = vmatpush1.msra.mxu0 %v67
    %80 = vmatprep.subr.mxu0 0.0
    %81 = vmatpush1.msra.mxu0 %v68
    %82 = vmatprep.subr.mxu0 0.0
    %83 = vmatpush1.msra.mxu0 %v69
    %84 = vmatprep.subr.mxu0 0.0
    %85 = vmatpush1.msra.mxu0 %v70
    %86 = vmatprep.subr.mxu0 0.0
    %87 = vmatpush1.msra.mxu0 0.0
    %88 = vmatprep.subr.mxu0 0.0
    %89 = vmatpush1.msra.mxu0 0.0
    %90 = vmatprep.subr.mxu0 0.0
    %91 = vmatpush1.msra.mxu0 0.0
    %92 = vmatprep.subr.mxu0 0.0
    %93 = vmatpush1.msra.mxu0 0.0
    %94 = vmatprep.subr.mxu0 0.0
    %95 = vmatpush1.msra.mxu0 0.0
    %96 = vmatprep.subr.mxu0 0.0
    %97 = vmatpush1.msra.mxu0 0.0
    %98 = vmatprep.subr.mxu0 0.0
    %99 = vmatpush1.msra.mxu0 0.0
    %100 = vmatprep.subr.mxu0 0.0
    %101 = vmatpush1.msra.mxu0 0.0
    %102 = vmatprep.subr.mxu0 0.0
    %103 = vmatpush1.msra.mxu0 0.0
    %104 = vmatprep.subr.mxu0 0.0
    %105 = vmatpush1.msra.mxu0 0.0
    %106 = vmatprep.subr.mxu0 0.0
    %107 = vmatpush1.msra.mxu0 0.0
    %108 = vmatprep.subr.mxu0 0.0
    %109 = vmatpush1.msra.mxu0 0.0
    %110 = vmatprep.subr.mxu0 0.0
    %111 = vmatpush1.msra.mxu0 0.0
    %112 = vmatprep.subr.mxu0 0.0
    %113 = vmatpush1.msra.mxu0 0.0
    %114 = vmatprep.subr.mxu0 0.0
    %115 = vmatpush1.msra.mxu0 0.0
    %116 = vmatprep.subr.mxu0 0.0
    %117 = vmatpush1.msra.mxu0 0.0
    %118 = vmatprep.subr.mxu0 0.0
    %119 = vmatpush1.msra.mxu0 0.0
    %120 = vmatprep.subr.mxu0 0.0
    %121 = vmatpush1.msra.mxu0 0.0
    %122 = vmatprep.subr.mxu0 0.0
    %123 = vmatpush1.msra.mxu0 0.0
    %124 = vmatprep.subr.mxu0 0.0
    %125 = vmatpush1.msra.mxu0 0.0
    %126 = vmatprep.subr.mxu0 0.0
    %127 = vmatpush1.msra.mxu0 0.0
    %128 = vmatprep.subr.mxu0 0.0
    %129 = vmatpush1.msra.mxu0 0.0
    %130 = vmatprep.subr.mxu0 0.0
    %131 = vmatpush1.msra.mxu0 0.0
    %132 = vmatprep.subr.mxu0 0.0
    %133 = vmatpush1.msra.mxu0 0.0
    %134 = vmatprep.subr.mxu0 0.0
    %135 = vmatpush1.msra.mxu0 0.0
    %136 = vmatprep.subr.mxu0 0.0
    %137 = vmatpush1.msra.mxu0 0.0
    %138 = vmatprep.subr.mxu0 0.0
    %139 = vmatpush1.msra.mxu0 0.0
    %140 = vmatprep.subr.mxu0 0.0
    %141 = vmatpush1.msra.mxu0 0.0
    %142 = vmatprep.mubr.f32.mxu0 0.0
    %143 = vmatmul.mubr.f32.gmra.mrb[0].mxu0 %v73
    %v144 = vpop.f32.mrb[0].mxu0
    %v145 = vadd.f32 0.0, %v144
    %v146 = vpop.f32.mrb[0].mxu0
    %147 = vmatprep.mubr.f32.mxu0 0.0
    %148 = vmatmul.mubr.f32.gmra.mrb[0].mxu0 %v76
    %v149 = vpop.f32.mrb[0].mxu0
    %v150 = vadd.f32 0.0, %v149
    %v151 = vpop.f32.mrb[0].mxu0
    %152 = vdwg.mxu0
    %v154 = vsel %vm71, %v59, 0
    %v157 = vsel %vm71, %v60, 0
    %159 = vmatprep.subr.mxu0 0.0
    %160 = vmatpush1.msra.mxu0 %v63
    %161 = vmatprep.subr.mxu0 0.0
    %162 = vmatpush1.msra.mxu0 %v64
    %163 = vmatprep.subr.mxu0 0.0
    %164 = vmatpush1.msra.mxu0 %v65
    %165 = vmatprep.subr.mxu0 0.0
    %166 = vmatpush1.msra.mxu0 %v66
    %167 = vmatprep.subr.mxu0 0.0
    %168 = vmatpush1.msra.mxu0 0.0
    %169 = vmatprep.subr.mxu0 0.0
    %170 = vmatpush1.msra.mxu0 0.0
    %171 = vmatprep.subr.mxu0 0.0
    %172 = vmatpush1.msra.mxu0 0.0
    %173 = vmatprep.subr.mxu0 0.0
    %174 = vmatpush1.msra.mxu0 0.0
    %175 = vmatprep.subr.mxu0 0.0
    %176 = vmatpush1.msra.mxu0 0.0
    %177 = vmatprep.subr.mxu0 0.0
    %178 = vmatpush1.msra.mxu0 0.0
    %179 = vmatprep.subr.mxu0 0.0
    %180 = vmatpush1.msra.mxu0 0.0
    %181 = vmatprep.subr.mxu0 0.0
    %182 = vmatpush1.msra.mxu0 0.0
    %183 = vmatprep.subr.mxu0 0.0
    %184 = vmatpush1.msra.mxu0 0.0
    %185 = vmatprep.subr.mxu0 0.0
    %186 = vmatpush1.msra.mxu0 0.0
    %187 = vmatprep.subr.mxu0 0.0
    %188 = vmatpush1.msra.mxu0 0.0
    %189 = vmatprep.subr.mxu0 0.0
    %190 = vmatpush1.msra.mxu0 0.0
    %191 = vmatprep.subr.mxu0 0.0
    %192 = vmatpush1.msra.mxu0 0.0
    %193 = vmatprep.subr.mxu0 0.0
    %194 = vmatpush1.msra.mxu0 0.0
    %195 = vmatprep.subr.mxu0 0.0
    %196 = vmatpush1.msra.mxu0 0.0
    %197 = vmatprep.subr.mxu0 0.0
    %198 = vmatpush1.msra.mxu0 0.0
    %199 = vmatprep.subr.mxu0 0.0
    %200 = vmatpush1.msra.mxu0 0.0
    %201 = vmatprep.subr.mxu0 0.0
    %202 = vmatpush1.msra.mxu0 0.0
    %203 = vmatprep.subr.mxu0 0.0
    %204 = vmatpush1.msra.mxu0 0.0
    %205 = vmatprep.subr.mxu0 0.0
    %206 = vmatpush1.msra.mxu0 0.0
    %207 = vmatprep.subr.mxu0 0.0
    %208 = vmatpush1.msra.mxu0 0.0
    %209 = vmatprep.subr.mxu0 0.0
    %210 = vmatpush1.msra.mxu0 0.0
    %211 = vmatprep.subr.mxu0 0.0
    %212 = vmatpush1.msra.mxu0 0.0
    %213 = vmatprep.subr.mxu0 0.0
    %214 = vmatpush1.msra.mxu0 0.0
    %215 = vmatprep.subr.mxu0 0.0
    %216 = vmatpush1.msra.mxu0 0.0
    %217 = vmatprep.subr.mxu0 0.0
    %218 = vmatpush1.msra.mxu0 0.0
    %219 = vmatprep.subr.mxu0 0.0
    %220 = vmatpush1.msra.mxu0 0.0
    %221 = vmatprep.subr.mxu0 0.0
    %222 = vmatpush1.msra.mxu0 0.0
    %223 = vmatprep.mubr.f32.mxu0 0.0
    %224 = vmatmul.mubr.f32.gmra.mrb[0].mxu0 %v154
    %v225 = vpop.f32.mrb[0].mxu0
    %v226 = vadd.f32 %v145, %v225
    %v227 = vpop.f32.mrb[0].mxu0
    %228 = vmatprep.mubr.f32.mxu0 0.0
    %229 = vmatmul.mubr.f32.gmra.mrb[0].mxu0 %v157
    %v230 = vpop.f32.mrb[0].mxu0
    %v231 = vadd.f32 %v150, %v230
    %v232 = vpop.f32.mrb[0].mxu0
    %233 = vdwg.mxu0
    %v234 = vmul.f32 %v59, %v61
    %v235 = vmul.f32 %v60, %v62
    %v236 = vld [vmem:[#allocation7 + $0x40] sm:$0xff]
    %v237 = vld [vmem:[#allocation7 + $0x48] sm:$0xff]
    %v238 = vld [vmem:[#allocation7 + $0x50] sm:$0xff]
    %v239 = vld [vmem:[#allocation7 + $0x58] sm:$0xff]
    %v241 = vsel %vm71, %v234, 0
    %v244 = vsel %vm71, %v235, 0
    %246 = vmatprep.subr.mxu0 0.0
    %247 = vmatpush1.msra.mxu0 %v236
    %248 = vmatprep.subr.mxu0 0.0
    %249 = vmatpush1.msra.mxu0 %v237
    %250 = vmatprep.subr.mxu0 0.0
    %251 = vmatpush1.msra.mxu0 %v238
    %252 = vmatprep.subr.mxu0 0.0
    %253 = vmatpush1.msra.mxu0 %v239
    %254 = vmatprep.subr.mxu0 0.0
    %255 = vmatpush1.msra.mxu0 0.0
    %256 = vmatprep.subr.mxu0 0.0
    %257 = vmatpush1.msra.mxu0 0.0
    %258 = vmatprep.subr.mxu0 0.0
    %259 = vmatpush1.msra.mxu0 0.0
    %260 = vmatprep.subr.mxu0 0.0
    %261 = vmatpush1.msra.mxu0 0.0
    %262 = vmatprep.subr.mxu0 0.0
    %263 = vmatpush1.msra.mxu0 0.0
    %264 = vmatprep.subr.mxu0 0.0
    %265 = vmatpush1.msra.mxu0 0.0
    %266 = vmatprep.subr.mxu0 0.0
    %267 = vmatpush1.msra.mxu0 0.0
    %268 = vmatprep.subr.mxu0 0.0
    %269 = vmatpush1.msra.mxu0 0.0
    %270 = vmatprep.subr.mxu0 0.0
    %271 = vmatpush1.msra.mxu0 0.0
    %272 = vmatprep.subr.mxu0 0.0
    %273 = vmatpush1.msra.mxu0 0.0
    %274 = vmatprep.subr.mxu0 0.0
    %275 = vmatpush1.msra.mxu0 0.0
    %276 = vmatprep.subr.mxu0 0.0
    %277 = vmatpush1.msra.mxu0 0.0
    %278 = vmatprep.subr.mxu0 0.0
    %279 = vmatpush1.msra.mxu0 0.0
    %280 = vmatprep.subr.mxu0 0.0
    %281 = vmatpush1.msra.mxu0 0.0
    %282 = vmatprep.subr.mxu0 0.0
    %283 = vmatpush1.msra.mxu0 0.0
    %284 = vmatprep.subr.mxu0 0.0
    %285 = vmatpush1.msra.mxu0 0.0
    %286 = vmatprep.subr.mxu0 0.0
    %287 = vmatpush1.msra.mxu0 0.0
    %288 = vmatprep.subr.mxu0 0.0
    %289 = vmatpush1.msra.mxu0 0.0
    %290 = vmatprep.subr.mxu0 0.0
    %291 = vmatpush1.msra.mxu0 0.0
    %292 = vmatprep.subr.mxu0 0.0
    %293 = vmatpush1.msra.mxu0 0.0
    %294 = vmatprep.subr.mxu0 0.0
    %295 = vmatpush1.msra.mxu0 0.0
    %296 = vmatprep.subr.mxu0 0.0
    %297 = vmatpush1.msra.mxu0 0.0
    %298 = vmatprep.subr.mxu0 0.0
    %299 = vmatpush1.msra.mxu0 0.0
    %300 = vmatprep.subr.mxu0 0.0
    %301 = vmatpush1.msra.mxu0 0.0
    %302 = vmatprep.subr.mxu0 0.0
    %303 = vmatpush1.msra.mxu0 0.0
    %304 = vmatprep.subr.mxu0 0.0
    %305 = vmatpush1.msra.mxu0 0.0
    %306 = vmatprep.subr.mxu0 0.0
    %307 = vmatpush1.msra.mxu0 0.0
    %308 = vmatprep.subr.mxu0 0.0
    %309 = vmatpush1.msra.mxu0 0.0
    %310 = vmatprep.mubr.f32.mxu0 0.0
    %311 = vmatmul.mubr.f32.gmra.mrb[0].mxu0 %v241
    %v312 = vpop.f32.mrb[0].mxu0
    %v313 = vadd.f32 0.0, %v312
    %v314 = vpop.f32.mrb[0].mxu0
    %315 = vmatprep.mubr.f32.mxu0 0.0
    %316 = vmatmul.mubr.f32.gmra.mrb[0].mxu0 %v244
    %v317 = vpop.f32.mrb[0].mxu0
    %v318 = vadd.f32 0.0, %v317
    %v319 = vpop.f32.mrb[0].mxu0
    %320 = vdwg.mxu0
    %v321 = vadd.f32 %v226, %v313
    %v322 = vadd.f32 %v231, %v318
    %v323 = vld [vmem:[%s3] sm:$0x1]
    %v325 = vlaneseq
    %v326 = vshrl.u32 %v325, 7
    %v327 = vsub.s32 0, %v326
    %v328 = vrot.slane %v323, %v327
    %v330 = vadd.f32 %v321, %v328
    %v331 = vadd.f32 %v322, %v328
    %v332 = vtanh.pop %v330
    %v333 = vtanh.pop %v331
    %334 = vst [vmem:[#allocation8] sm:$0xff] %v332
    %335 = vst [vmem:[#allocation8 + $0x8] sm:$0xff] %v333
    // Predicated region
    $region30: #{tpu_custom_call.1} parent=1 // pred_check
      _
    $region31: #{tpu_custom_call.1} parent=1 // pred_check_branch
      %337 = sbr.rel (0) target = $region33
    $region32: #{tpu_custom_call.1} parent=1 // pred_region
      %s339 = ssub.s32 256, 256
      %340 = vsyncadd [#allocation4], %s339
      %s341 = sshll.u32 [#allocation8], 4
      %s342 = int_to_ptr.vmem [resolvable:$true] %s341
      %347 = dma.vmem_to_hbm [thread:$0]  %s342, 256, %s4, [#allocation4], 128, 128, 8
    $region33: #{tpu_custom_call.1} parent=1 // pred_fallthru
      _
    // Predicated region
    $region34: #{tpu_custom_call.1} parent=1 // pred_check
      _
    $region35: #{tpu_custom_call.1} parent=1 // pred_check_branch
      %349 = sbr.rel (0) target = $region37
    $region36: #{tpu_custom_call.1} parent=1 // pred_region
      %350 = dma.done [#allocation4], 256
    $region37: #{tpu_custom_call.1} parent=1 // pred_fallthru
      _
    %351 = vsyncpa [#allocation3], 1
    %352 = vsyncpa [#allocation6], 1
    %353 = vsyncpa [#allocation4], 1

</llo_original>
